<compile_context>
chip_gen: v7x
topology: tpu7x:2x2x1
jax: 0.10.0
libtpu: 0.0.40
codegen_flags: <defaults>
</compile_context>

<pallas_src>
import functools
import math

import jax
import jax.numpy as jnp
from jax.experimental import pallas as pl
from jax.experimental.pallas import tpu as pltpu


def _softplus(z, use_bf16):
    # Numerically stable softplus; matches torch.nn.Softplus(beta=1, threshold=20)
    # to well below 1e-6 in f32.  With use_bf16=True the exp/log1p (the EUP
    # bottleneck) run in bf16 (~2x EUP rate on v6e/v7x), costing ~1e-2 accuracy.
    if use_bf16:
        z = z.astype(jnp.bfloat16)
    r = jnp.maximum(z, 0.0) + jnp.log1p(jnp.exp(-jnp.abs(z)))
    return r.astype(jnp.float32)


def odenet_kernel(t_ref, y_ref, c_ref,
                  w0y_ref, w0c_ref, w0t_ref, b0_ref,
                  w1_ref, w1t_ref, b1_ref,
                  w2_ref, w2t_ref, b2_ref,
                  out_ref, *, softplus_bf16):
    """One batch block of the 3-layer ConcatLinear MLP, feature-major (F, B)."""
    t = t_ref[0]                 # scalar time, lives in SMEM
    y = y_ref[...]               # (D, TB): batch on the 128-lane axis
    c = c_ref[...]               # (C, TB)

    # Layer 0: W0 @ [y; cond] + t*w0t + b0 -> softplus.
    # The concat is fused as two split-weight matmuls (MXU has huge slack here).
    z = (jnp.dot(w0y_ref[...], y, preferred_element_type=jnp.float32)
         + jnp.dot(w0c_ref[...], c, preferred_element_type=jnp.float32)
         + t * w0t_ref[...] + b0_ref[...])
    h = _softplus(z, softplus_bf16)

    # Layer 1: W1 @ h + t*w1t + b1 -> softplus
    z = (jnp.dot(w1_ref[...], h, preferred_element_type=jnp.float32)
         + t * w1t_ref[...] + b1_ref[...])
    h = _softplus(z, softplus_bf16)

    # Layer 2: W2 @ h + t*w2t + b2 (no activation on the last layer)
    out = (jnp.dot(w2_ref[...], h, preferred_element_type=jnp.float32)
           + t * w2t_ref[...] + b2_ref[...])
    out_ref[...] = out.astype(out_ref.dtype)


def init_params(key, input_dim, cond_dim, hidden_dims):
    """Deterministic torch.nn.Linear-style init for ConcatLinear layers.

    Layer l weight has shape (out, in+1) where column 0 is the time column.
    Layer 0's input is input_dim + cond_dim; later layers take the hidden dim.
    """
    dims_in = [input_dim + cond_dim] + list(hidden_dims)
    dims_out = list(hidden_dims) + [input_dim]
    params = []
    for d_in, d_out in zip(dims_in, dims_out):
        key, kw, kb = jax.random.split(key, 3)
        bound = 1.0 / math.sqrt(d_in + 1)
        w = jax.random.uniform(kw, (d_out, d_in + 1), jnp.float32, -bound, bound)
        b = jax.random.uniform(kb, (d_out,), jnp.float32, -bound, bound)
        params.append((w, b))
    return params


def _round_up(x, m):
    return ((x + m - 1) // m) * m


def _choose_batch_block(B, block_b):
    """Pick (tile_b, padded_b): big blocks to amortize per-step overhead, but
    >=2 blocks whenever B > 128 so v7x can shard the batch across its 2 TCs."""
    b128 = _round_up(B, 128)
    if b128 <= 128:
        return 128, 128
    block_b = max(128, _round_up(block_b, 128))
    n_blocks = max(2, -(-b128 // block_b))
    tb = max(128, _round_up(-(-b128 // n_blocks), 128))
    return tb, tb * n_blocks


def odenet_forward_fm(t, y_fm, cond_fm, params, *, block_b=4096,
                      softplus_bf16=False):
    """Feature-major forward: y_fm (D, B), cond_fm (C, B) -> (D, B).

    Preferred entry point: an ODE solver that keeps its state feature-major
    pays zero wrapper-side transpose/concat HBM passes per step.
    """
    D, B = y_fm.shape
    C = cond_fm.shape[0]
    (w0, b0), (w1, b1), (w2, b2) = params
    h0, h1 = w0.shape[0], w1.shape[0]

    # ConcatLinear weight layout: column 0 multiplies t, columns 1: multiply the
    # concatenated [y | cond] (layer 0) or the hidden features (layers 1/2).
    w0t = w0[:, 0:1]                          # (h0, 1)
    w0y = w0[:, 1:1 + D]                      # (h0, D)
    w0c = w0[:, 1 + D:]                       # (h0, C)
    w1t, w1x = w1[:, 0:1], w1[:, 1:]          # (h1, 1), (h1, h0)
    w2t, w2x = w2[:, 0:1], w2[:, 1:]          # (D, 1),  (D, h1)
    b0c = b0.reshape(h0, 1)
    b1c = b1.reshape(h1, 1)
    b2c = b2.reshape(D, 1)

    tb, b_pad = _choose_batch_block(B, block_b)
    if b_pad != B:
        y_fm = jnp.pad(y_fm, ((0, 0), (0, b_pad - B)))
        cond_fm = jnp.pad(cond_fm, ((0, 0), (0, b_pad - B)))
    grid = (b_pad // tb,)

    t_arr = jnp.asarray(t, jnp.float32).reshape((1,))
    smem = pl.BlockSpec(memory_space=pltpu.MemorySpace.SMEM)

    def resident(shape):
        # Same block on every grid step -> stays resident in VMEM, no re-DMA.
        return pl.BlockSpec(shape, lambda b: (0, 0))

    weight_bytes = sum(int(a.size) * a.dtype.itemsize
                       for a in (w0y, w0c, w0t, b0c, w1x, w1t, b1c, w2x, w2t, b2c))
    cost = pl.CostEstimate(
        flops=2 * b_pad * ((D + C) * h0 + h0 * h1 + h1 * D),
        transcendentals=2 * b_pad * (h0 + h1),   # exp + log1p per hidden elem
        bytes_accessed=int(4 * b_pad * (D + C) + 4 * b_pad * D + weight_bytes),
    )

    out_fm = pl.pallas_call(
        functools.partial(odenet_kernel, softplus_bf16=softplus_bf16),
        out_shape=jax.ShapeDtypeStruct((D, b_pad), jnp.float32),
        grid_spec=pltpu.PrefetchScalarGridSpec(
            num_scalar_prefetch=0,
            grid=grid,
            in_specs=[
                smem,                                      # t (scalar in SMEM)
                pl.BlockSpec((D, tb), lambda b: (0, b)),   # y block
                pl.BlockSpec((C, tb), lambda b: (0, b)),   # cond block
                resident((h0, D)), resident((h0, C)),
                resident((h0, 1)), resident((h0, 1)),
                resident((h1, h0)), resident((h1, 1)), resident((h1, 1)),
                resident((D, h1)), resident((D, 1)), resident((D, 1)),
            ],
            out_specs=pl.BlockSpec((D, tb), lambda b: (0, b)),
        ),
        compiler_params=pltpu.CompilerParams(
            dimension_semantics=("parallel",)),
        cost_estimate=cost,
    )(t_arr, y_fm, cond_fm,
      w0y, w0c, w0t, b0c,
      w1x, w1t, b1c,
      w2x, w2t, b2c)

    return out_fm[:, :B] if b_pad != B else out_fm


def odenet_forward(t, y, cond, params, **kwargs):
    """Batch-major (PyTorch-layout) compatibility wrapper: y (B, D) -> (B, D).

    Pays two transpose passes; prefer odenet_forward_fm inside an ODE solver.
    """
    return odenet_forward_fm(t, y.T, cond.T, params, **kwargs).T


def _softplus_torch(x):
    # matches torch.nn.Softplus(beta=1, threshold=20) exactly as written
    return jnp.where(x > 20.0, x, jnp.log1p(jnp.exp(jnp.minimum(x, 20.0))))


def odenet_reference(t, y, cond, params):
    """Pure-JAX reference mirroring the PyTorch forward."""
    dx = jnp.concatenate([y, cond], axis=1)
    n = len(params)
    for l, (w, b) in enumerate(params):
        tt = jnp.full((dx.shape[0], 1), t, dx.dtype)
        ttx = jnp.concatenate([tt, dx], axis=1)
        dx = ttx @ w.T + b
        if l < n - 1:
            dx = _softplus_torch(dx)
    return dx


if __name__ == "__main__":
    B, D, C = 256, 4, 2          # batch, input feature dim, conditional dims
    hidden_dims = (32, 32)
    t = 0.37

    key = jax.random.PRNGKey(0)
    ky, kc, kp = jax.random.split(key, 3)
    y = jax.random.normal(ky, (B, D), jnp.float32)
    cond = jax.random.normal(kc, (B, C), jnp.float32)
    params = init_params(kp, D, C, hidden_dims)

    ref = odenet_reference(t, y, cond, params)          # (B, D)

    # Preferred feature-major path (solver keeps state as (D, B) / (C, B));
    # B=256 -> two 128-wide batch blocks, exercises the grid + resident weights.
    y_fm, cond_fm = y.T, cond.T
    out_fm = odenet_forward_fm(t, y_fm, cond_fm, params)
    out_fm = jax.block_until_ready(out_fm)
    assert out_fm.shape == (D, B)
    assert jnp.allclose(out_fm, ref.T, atol=1e-5, rtol=1e-5)

    # Batch-major compatibility wrapper (PyTorch layout).
    out_bm = jax.block_until_ready(odenet_forward(t, y, cond, params))
    assert out_bm.shape == (B, D)
    assert jnp.allclose(out_bm, ref, atol=1e-5, rtol=1e-5)

    # bf16-softplus fast path (EUP win on v6e/v7x): loose smoke check only —
    # bf16 transcendentals trade ~1e-2 accuracy for ~2x EUP throughput.
    out_bf = jax.block_until_ready(
        odenet_forward_fm(t, y_fm, cond_fm, params, softplus_bf16=True))
    assert out_bf.shape == (D, B)
    assert bool(jnp.max(jnp.abs(out_bf - ref.T)) < 0.5)

    print("KERNEL_OK")
</pallas_src>

<mosaic_0001>
module attributes {stable_mosaic.version = 11 : i64} {
  func.func @odenet_kernel(%arg0: i32, %arg1: memref<1xf32, #tpu.memory_space<smem>>, %arg2: memref<4x128xf32, #tpu.memory_space<vmem>>, %arg3: memref<2x128xf32, #tpu.memory_space<vmem>>, %arg4: memref<32x4xf32, #tpu.memory_space<vmem>>, %arg5: memref<32x2xf32, #tpu.memory_space<vmem>>, %arg6: memref<32x1xf32, #tpu.memory_space<vmem>>, %arg7: memref<32x1xf32, #tpu.memory_space<vmem>>, %arg8: memref<32x32xf32, #tpu.memory_space<vmem>>, %arg9: memref<32x1xf32, #tpu.memory_space<vmem>>, %arg10: memref<32x1xf32, #tpu.memory_space<vmem>>, %arg11: memref<4x32xf32, #tpu.memory_space<vmem>>, %arg12: memref<4x1xf32, #tpu.memory_space<vmem>>, %arg13: memref<4x1xf32, #tpu.memory_space<vmem>>, %arg14: memref<4x128xf32, #tpu.memory_space<vmem>>) attributes {dimension_semantics = [#tpu.dimension_semantics<parallel>], iteration_bounds = array<i64: 2>, scalar_prefetch = 0 : i64, scratch_operands = 0 : i64, tpu.core_type = #tpu.core_type<tc>, window_params = [{transform_indices = @transform_0, window_bounds = array<i64: 1>}, {transform_indices = @transform_1, window_bounds = array<i64: 4, 128>}, {transform_indices = @transform_2, window_bounds = array<i64: 2, 128>}, {pipeline_mode = #tpu.pipeline_mode<synchronous>, transform_indices = @transform_3, window_bounds = array<i64: 32, 4>}, {pipeline_mode = #tpu.pipeline_mode<synchronous>, transform_indices = @transform_4, window_bounds = array<i64: 32, 2>}, {pipeline_mode = #tpu.pipeline_mode<synchronous>, transform_indices = @transform_5, window_bounds = array<i64: 32, 1>}, {pipeline_mode = #tpu.pipeline_mode<synchronous>, transform_indices = @transform_6, window_bounds = array<i64: 32, 1>}, {pipeline_mode = #tpu.pipeline_mode<synchronous>, transform_indices = @transform_7, window_bounds = array<i64: 32, 32>}, {pipeline_mode = #tpu.pipeline_mode<synchronous>, transform_indices = @transform_8, window_bounds = array<i64: 32, 1>}, {pipeline_mode = #tpu.pipeline_mode<synchronous>, transform_indices = @transform_9, window_bounds = array<i64: 32, 1>}, {pipeline_mode = #tpu.pipeline_mode<synchronous>, transform_indices = @transform_10, window_bounds = array<i64: 4, 32>}, {pipeline_mode = #tpu.pipeline_mode<synchronous>, transform_indices = @transform_11, window_bounds = array<i64: 4, 1>}, {pipeline_mode = #tpu.pipeline_mode<synchronous>, transform_indices = @transform_12, window_bounds = array<i64: 4, 1>}, {transform_indices = @transform_13, window_bounds = array<i64: 4, 128>}]} {
    %c0 = arith.constant 0 : index
    %0 = memref.load %arg1[%c0] : memref<1xf32, #tpu.memory_space<smem>>
    %c0_0 = arith.constant 0 : index
    %c0_1 = arith.constant 0 : index
    %1 = vector.load %arg2[%c0_0, %c0_1] : memref<4x128xf32, #tpu.memory_space<vmem>>, vector<4x128xf32>
    %c0_2 = arith.constant 0 : index
    %c0_3 = arith.constant 0 : index
    %2 = vector.load %arg3[%c0_2, %c0_3] : memref<2x128xf32, #tpu.memory_space<vmem>>, vector<2x128xf32>
    %c0_4 = arith.constant 0 : index
    %c0_5 = arith.constant 0 : index
    %3 = vector.load %arg4[%c0_4, %c0_5] : memref<32x4xf32, #tpu.memory_space<vmem>>, vector<32x4xf32>
    %cst = arith.constant dense<0.000000e+00> : vector<32x128xf32>
    %4 = tpu.matmul %3, %1, %cst {dimension_numbers = #tpu.dot_dimension_numbers<[1], [0], [0], [1], [0, 0, 1, 1], [], []>} : vector<32x4xf32>, vector<4x128xf32>, vector<32x128xf32> -> vector<32x128xf32>
    %c0_6 = arith.constant 0 : index
    %c0_7 = arith.constant 0 : index
    %5 = vector.load %arg5[%c0_6, %c0_7] : memref<32x2xf32, #tpu.memory_space<vmem>>, vector<32x2xf32>
    %cst_8 = arith.constant dense<0.000000e+00> : vector<32x128xf32>
    %6 = tpu.matmul %5, %2, %cst_8 {dimension_numbers = #tpu.dot_dimension_numbers<[1], [0], [0], [1], [0, 0, 1, 1], [], []>} : vector<32x2xf32>, vector<2x128xf32>, vector<32x128xf32> -> vector<32x128xf32>
    %7 = arith.addf %4, %6 : vector<32x128xf32>
    %c0_9 = arith.constant 0 : index
    %c0_10 = arith.constant 0 : index
    %8 = vector.load %arg6[%c0_9, %c0_10] : memref<32x1xf32, #tpu.memory_space<vmem>>, vector<32x1xf32>
    %9 = vector.broadcast %0 : f32 to vector<32x1xf32>
    %10 = arith.mulf %9, %8 : vector<32x1xf32>
    %11 = vector.broadcast %10 : vector<32x1xf32> to vector<32x128xf32>
    %12 = arith.addf %7, %11 : vector<32x128xf32>
    %c0_11 = arith.constant 0 : index
    %c0_12 = arith.constant 0 : index
    %13 = vector.load %arg7[%c0_11, %c0_12] : memref<32x1xf32, #tpu.memory_space<vmem>>, vector<32x1xf32>
    %14 = vector.broadcast %13 : vector<32x1xf32> to vector<32x128xf32>
    %15 = arith.addf %12, %14 : vector<32x128xf32>
    %cst_13 = arith.constant 0.000000e+00 : f32
    %16 = vector.broadcast %cst_13 : f32 to vector<32x128xf32>
    %17 = arith.maximumf %15, %16 : vector<32x128xf32>
    %18 = math.absf %15 : vector<32x128xf32>
    %cst_14 = arith.constant 0.000000e+00 : f32
    %19 = vector.broadcast %cst_14 : f32 to vector<32x128xf32>
    %20 = arith.subf %19, %18 : vector<32x128xf32>
    %21 = math.exp %20 : vector<32x128xf32>
    %22 = math.log1p %21 : vector<32x128xf32>
    %23 = arith.addf %17, %22 : vector<32x128xf32>
    %c0_15 = arith.constant 0 : index
    %c0_16 = arith.constant 0 : index
    %24 = vector.load %arg8[%c0_15, %c0_16] : memref<32x32xf32, #tpu.memory_space<vmem>>, vector<32x32xf32>
    %cst_17 = arith.constant dense<0.000000e+00> : vector<32x128xf32>
    %25 = tpu.matmul %24, %23, %cst_17 {dimension_numbers = #tpu.dot_dimension_numbers<[1], [0], [0], [1], [0, 0, 1, 1], [], []>} : vector<32x32xf32>, vector<32x128xf32>, vector<32x128xf32> -> vector<32x128xf32>
    %c0_18 = arith.constant 0 : index
    %c0_19 = arith.constant 0 : index
    %26 = vector.load %arg9[%c0_18, %c0_19] : memref<32x1xf32, #tpu.memory_space<vmem>>, vector<32x1xf32>
    %27 = vector.broadcast %0 : f32 to vector<32x1xf32>
    %28 = arith.mulf %27, %26 : vector<32x1xf32>
    %29 = vector.broadcast %28 : vector<32x1xf32> to vector<32x128xf32>
    %30 = arith.addf %25, %29 : vector<32x128xf32>
    %c0_20 = arith.constant 0 : index
    %c0_21 = arith.constant 0 : index
    %31 = vector.load %arg10[%c0_20, %c0_21] : memref<32x1xf32, #tpu.memory_space<vmem>>, vector<32x1xf32>
    %32 = vector.broadcast %31 : vector<32x1xf32> to vector<32x128xf32>
    %33 = arith.addf %30, %32 : vector<32x128xf32>
    %cst_22 = arith.constant 0.000000e+00 : f32
    %34 = vector.broadcast %cst_22 : f32 to vector<32x128xf32>
    %35 = arith.maximumf %33, %34 : vector<32x128xf32>
    %36 = math.absf %33 : vector<32x128xf32>
    %cst_23 = arith.constant 0.000000e+00 : f32
    %37 = vector.broadcast %cst_23 : f32 to vector<32x128xf32>
    %38 = arith.subf %37, %36 : vector<32x128xf32>
    %39 = math.exp %38 : vector<32x128xf32>
    %40 = math.log1p %39 : vector<32x128xf32>
    %41 = arith.addf %35, %40 : vector<32x128xf32>
    %c0_24 = arith.constant 0 : index
    %c0_25 = arith.constant 0 : index
    %42 = vector.load %arg11[%c0_24, %c0_25] : memref<4x32xf32, #tpu.memory_space<vmem>>, vector<4x32xf32>
    %cst_26 = arith.constant dense<0.000000e+00> : vector<4x128xf32>
    %43 = tpu.matmul %42, %41, %cst_26 {dimension_numbers = #tpu.dot_dimension_numbers<[1], [0], [0], [1], [0, 0, 1, 1], [], []>} : vector<4x32xf32>, vector<32x128xf32>, vector<4x128xf32> -> vector<4x128xf32>
    %c0_27 = arith.constant 0 : index
    %c0_28 = arith.constant 0 : index
    %44 = vector.load %arg12[%c0_27, %c0_28] : memref<4x1xf32, #tpu.memory_space<vmem>>, vector<4x1xf32>
    %45 = vector.broadcast %0 : f32 to vector<4x1xf32>
    %46 = arith.mulf %45, %44 : vector<4x1xf32>
    %47 = vector.broadcast %46 : vector<4x1xf32> to vector<4x128xf32>
    %48 = arith.addf %43, %47 : vector<4x128xf32>
    %c0_29 = arith.constant 0 : index
    %c0_30 = arith.constant 0 : index
    %49 = vector.load %arg13[%c0_29, %c0_30] : memref<4x1xf32, #tpu.memory_space<vmem>>, vector<4x1xf32>
    %50 = vector.broadcast %49 : vector<4x1xf32> to vector<4x128xf32>
    %51 = arith.addf %48, %50 : vector<4x128xf32>
    %c0_31 = arith.constant 0 : index
    %c0_32 = arith.constant 0 : index
    %52 = vector.load %arg14[%c0_31, %c0_32] : memref<4x128xf32, #tpu.memory_space<vmem>>, vector<4x128xf32>
    tpu.vector_store %arg14[%c0_31, %c0_32], %51 {strides = array<i32>} : memref<4x128xf32, #tpu.memory_space<vmem>>, vector<4x128xf32>,
    return
  }
  func.func @transform_0(%arg0: i32) -> i32 {
    %c0_i32 = arith.constant 0 : i32
    %c0_i32_0 = arith.constant 0 : i32
    return %c0_i32 : i32
  }
  func.func @transform_1(%arg0: i32) -> (i32, i32) {
    %c0_i32 = arith.constant 0 : i32
    %c0_i32_0 = arith.constant 0 : i32
    return %c0_i32, %arg0 : i32, i32
  }
  func.func @transform_2(%arg0: i32) -> (i32, i32) {
    %c0_i32 = arith.constant 0 : i32
    %c0_i32_0 = arith.constant 0 : i32
    return %c0_i32, %arg0 : i32, i32
  }
  func.func @transform_3(%arg0: i32) -> (i32, i32) {
    %c0_i32 = arith.constant 0 : i32
    %c0_i32_0 = arith.constant 0 : i32
    %c0_i32_1 = arith.constant 0 : i32
    return %c0_i32, %c0_i32_0 : i32, i32
  }
  func.func @transform_4(%arg0: i32) -> (i32, i32) {
    %c0_i32 = arith.constant 0 : i32
    %c0_i32_0 = arith.constant 0 : i32
    %c0_i32_1 = arith.constant 0 : i32
    return %c0_i32, %c0_i32_0 : i32, i32
  }
  func.func @transform_5(%arg0: i32) -> (i32, i32) {
    %c0_i32 = arith.constant 0 : i32
    %c0_i32_0 = arith.constant 0 : i32
    %c0_i32_1 = arith.constant 0 : i32
    return %c0_i32, %c0_i32_0 : i32, i32
  }
  func.func @transform_6(%arg0: i32) -> (i32, i32) {
    %c0_i32 = arith.constant 0 : i32
    %c0_i32_0 = arith.constant 0 : i32
    %c0_i32_1 = arith.constant 0 : i32
    return %c0_i32, %c0_i32_0 : i32, i32
  }
  func.func @transform_7(%arg0: i32) -> (i32, i32) {
    %c0_i32 = arith.constant 0 : i32
    %c0_i32_0 = arith.constant 0 : i32
    %c0_i32_1 = arith.constant 0 : i32
    return %c0_i32, %c0_i32_0 : i32, i32
  }
  func.func @transform_8(%arg0: i32) -> (i32, i32) {
    %c0_i32 = arith.constant 0 : i32
    %c0_i32_0 = arith.constant 0 : i32
    %c0_i32_1 = arith.constant 0 : i32
    return %c0_i32, %c0_i32_0 : i32, i32
  }
  func.func @transform_9(%arg0: i32) -> (i32, i32) {
    %c0_i32 = arith.constant 0 : i32
    %c0_i32_0 = arith.constant 0 : i32
    %c0_i32_1 = arith.constant 0 : i32
    return %c0_i32, %c0_i32_0 : i32, i32
  }
  func.func @transform_10(%arg0: i32) -> (i32, i32) {
    %c0_i32 = arith.constant 0 : i32
    %c0_i32_0 = arith.constant 0 : i32
    %c0_i32_1 = arith.constant 0 : i32
    return %c0_i32, %c0_i32_0 : i32, i32
  }
  func.func @transform_11(%arg0: i32) -> (i32, i32) {
    %c0_i32 = arith.constant 0 : i32
    %c0_i32_0 = arith.constant 0 : i32
    %c0_i32_1 = arith.constant 0 : i32
    return %c0_i32, %c0_i32_0 : i32, i32
  }
  func.func @transform_12(%arg0: i32) -> (i32, i32) {
    %c0_i32 = arith.constant 0 : i32
    %c0_i32_0 = arith.constant 0 : i32
    %c0_i32_1 = arith.constant 0 : i32
    return %c0_i32, %c0_i32_0 : i32, i32
  }
  func.func @transform_13(%arg0: i32) -> (i32, i32) {
    %c0_i32 = arith.constant 0 : i32
    %c0_i32_0 = arith.constant 0 : i32
    return %c0_i32, %arg0 : i32, i32
  }
}

</mosaic_0001>

<llo_original>
// kernel: tpu_custom_call.1
$region0: #{tpu_custom_call.1}
  #allocation0 [shape = 'u32[]', space=smem, size = 0x4, offset = 0x4, fixed_abs, tag = 'smem constant byte address 0x4 - core index']
  #allocation1 [shape = 'u32[144,128]{1,0:T(1,128)}', space=vmem, size = 0x12000, scoped, tag = 'internal scratch']
  #allocation2 [shape = 'f32[1]{0:T(128)S(6)}', space=smem, size = 0x200, scoped, tag = 'scoped memory for tpu_custom_call.1']
  %s0 = inlined_call_operand.<no memory space> [shape: f32[1], index: 0, kind: input, shape index: {}]
  %s1 = inlined_call_operand.vmem [shape: f32[4,256], index: 1, kind: input, shape index: {}]
  %s2 = inlined_call_operand.vmem [shape: f32[2,256], index: 2, kind: input, shape index: {}]
  %s3 = inlined_call_operand.vmem [shape: f32[32,4], index: 3, kind: input, shape index: {}]
  %s4 = inlined_call_operand.vmem [shape: f32[32,2], index: 4, kind: input, shape index: {}]
  %s5 = inlined_call_operand.vmem [shape: f32[32,1], index: 5, kind: input, shape index: {}]
  %s6 = inlined_call_operand.vmem [shape: f32[32,1], index: 6, kind: input, shape index: {}]
  %s7 = inlined_call_operand.vmem [shape: f32[32,32], index: 7, kind: input, shape index: {}]
  %s8 = inlined_call_operand.vmem [shape: f32[32,1], index: 8, kind: input, shape index: {}]
  %s9 = inlined_call_operand.vmem [shape: f32[32,1], index: 9, kind: input, shape index: {}]
  %s10 = inlined_call_operand.vmem [shape: f32[4,32], index: 10, kind: input, shape index: {}]
  %s11 = inlined_call_operand.vmem [shape: f32[4,1], index: 11, kind: input, shape index: {}]
  %s12 = inlined_call_operand.vmem [shape: f32[4,1], index: 12, kind: input, shape index: {}]
  %s13 = inlined_call_operand.hbm [shape: f32[4,256], index: 13, kind: output, shape index: {}]
  %s14 = sld [smem:[#allocation0]]
  $region85: #{tpu_custom_call.1} parent=0
    _
  %s16 = ssub.s32 1, %s14
  %s17 = scalar_select 0, %s16, %s14
  %18 = sst [smem:[#allocation2]] %s0
  $region1: #{tpu_custom_call.1} parent=0
    #allocation3 [shape = 'u8[4096]{0}', space=vmem, size = 0x1000, scoped, tag = 'output window, operand 0']
    #allocation4 [shape = 's32[2]{0}', space=sflag, size = 0x8, scoped, tag = 'scoped memory for tpu_custom_call.1']
    %19 = vsyncpa [#allocation4], 0
    %s20 = scalar_lea.sflag [#allocation4], 1
    %21 = vsyncpa %s20, 0
    loop: start=0, step=1, limit=4
    $region2: #{tpu_custom_call.1} parent=1 // loop_pre_header
      _
    $region3: #{tpu_custom_call.1} parent=1 // loop_header
      %s23 = sphi 0, %s27
      %p24 = scmp.ge.s32.totalorder %s23, 4
      %s31 = sphi 0, %s31
      %s33 = sphi 0, %s31
      %s34 = sphi 0, %s33
      %s48 = sphi 0, %s34
      %s54 = sphi 0, %s56
      %s57 = sphi 0, %s54
      %s58 = sphi 0, %s57
      %s74 = sphi 0, %s58
      %s80 = sphi 0, %s82
      %s83 = sphi 0, %s80
      %s84 = sphi 0, %s83
      %s100 = sphi 0, %s84
      %s104 = sphi 0, %s104
      %s106 = sphi 0, %s104
      %s107 = sphi 0, %s106
      %s121 = sphi 0, %s107
      %s125 = sphi 0, %s125
      %s127 = sphi 0, %s125
      %s128 = sphi 0, %s127
      %s142 = sphi 0, %s128
      %s146 = sphi 0, %s146
      %s148 = sphi 0, %s146
      %s149 = sphi 0, %s148
      %s163 = sphi 0, %s149
      %s167 = sphi 0, %s167
      %s169 = sphi 0, %s167
      %s170 = sphi 0, %s169
      %s184 = sphi 0, %s170
      %s188 = sphi 0, %s188
      %s190 = sphi 0, %s188
      %s191 = sphi 0, %s190
      %s205 = sphi 0, %s191
      %s209 = sphi 0, %s209
      %s211 = sphi 0, %s209
      %s212 = sphi 0, %s211
      %s226 = sphi 0, %s212
      %s230 = sphi 0, %s230
      %s232 = sphi 0, %s230
      %s233 = sphi 0, %s232
      %s247 = sphi 0, %s233
      %s251 = sphi 0, %s251
      %s253 = sphi 0, %s251
      %s254 = sphi 0, %s253
      %s268 = sphi 0, %s254
      %s272 = sphi 0, %s272
      %s274 = sphi 0, %s272
      %s275 = sphi 0, %s274
      %s289 = sphi 0, %s275
      %s293 = sphi 0, %s293
      %s295 = sphi 0, %s293
      %s296 = sphi 0, %s295
      %s310 = sphi 0, %s296
      %s316 = sphi 0, %s318
      %s319 = sphi 0, %s316
      %s320 = sphi 0, %s319
      %s336 = sphi 0, %s320
    $region4: #{tpu_custom_call.1} parent=1 // loop_header_branch
      %26 = sbr.rel (%p24) target = $region8
    $region5: #{tpu_custom_call.1} parent=1 // loop_body
      %s28 = ssub.s32 %s23, 1
      %s29 = ssub.s32 %s23, 2
      %s30 = sadd.s32 %s23, 1
      %s32 = sadd.s32 %s31, 1
      %p35 = scmp.eq.s32.totalorder %s23, 1
      %p36 = scmp.ne.s32.totalorder %s31, %s33
      %p37 = scmp.eq.s32.totalorder %s23, 0
      %p38 = por %p36, %p37
      %p39 = scmp.ne.s32.totalorder %s31, %s33
      %p40 = scmp.eq.s32.totalorder %s28, 1
      %p41 = por %p39, %p40
      %p42 = scmp.ne.s32.totalorder %s33, %s34
      %p43 = scmp.eq.s32.totalorder %s28, 0
      %p44 = por %p42, %p43
      %p45 = scmp.ne.s32.totalorder %s33, %s34
      %p46 = scmp.eq.s32.totalorder %s29, 1
      %p47 = por %p45, %p46
      %p49 = scmp.ne.s32.totalorder %s34, %s48
      %p50 = scmp.eq.s32.totalorder %s29, 0
      %p51 = por %p49, %p50
      %s52 = ssub.s32 %s23, %s30
      %p53 = scmp.eq.s32.totalorder %s52, 0
      %s55 = sadd.s32 %s54, 1
      %s56 = scalar_select %p53, %s54, %s55
      %p59 = pneg %p53
      %p60 = scmp.eq.s32.totalorder %s23, 1
      %p61 = por %p59, %p60
      %p62 = scmp.ne.s32.totalorder %s54, %s57
      %p63 = scmp.eq.s32.totalorder %s23, 0
      %p64 = por %p62, %p63
      %p65 = scmp.ne.s32.totalorder %s54, %s57
      %p66 = scmp.eq.s32.totalorder %s28, 1
      %p67 = por %p65, %p66
      %p68 = scmp.ne.s32.totalorder %s57, %s58
      %p69 = scmp.eq.s32.totalorder %s28, 0
      %p70 = por %p68, %p69
      %p71 = scmp.ne.s32.totalorder %s57, %s58
      %p72 = scmp.eq.s32.totalorder %s29, 1
      %p73 = por %p71, %p72
      %p75 = scmp.ne.s32.totalorder %s58, %s74
      %p76 = scmp.eq.s32.totalorder %s29, 0
      %p77 = por %p75, %p76
      %s78 = ssub.s32 %s23, %s30
      %p79 = scmp.eq.s32.totalorder %s78, 0
      %s81 = sadd.s32 %s80, 1
      %s82 = scalar_select %p79, %s80, %s81
      %p85 = pneg %p79
      %p86 = scmp.eq.s32.totalorder %s23, 1
      %p87 = por %p85, %p86
      %p88 = scmp.ne.s32.totalorder %s80, %s83
      %p89 = scmp.eq.s32.totalorder %s23, 0
      %p90 = por %p88, %p89
      %p91 = scmp.ne.s32.totalorder %s80, %s83
      %p92 = scmp.eq.s32.totalorder %s28, 1
      %p93 = por %p91, %p92
      %p94 = scmp.ne.s32.totalorder %s83, %s84
      %p95 = scmp.eq.s32.totalorder %s28, 0
      %p96 = por %p94, %p95
      %p97 = scmp.ne.s32.totalorder %s83, %s84
      %p98 = scmp.eq.s32.totalorder %s29, 1
      %p99 = por %p97, %p98
      %p101 = scmp.ne.s32.totalorder %s84, %s100
      %p102 = scmp.eq.s32.totalorder %s29, 0
      %p103 = por %p101, %p102
      %s105 = sadd.s32 %s104, 1
      %p108 = scmp.eq.s32.totalorder %s23, 1
      %p109 = scmp.ne.s32.totalorder %s104, %s106
      %p110 = scmp.eq.s32.totalorder %s23, 0
      %p111 = por %p109, %p110
      %p112 = scmp.ne.s32.totalorder %s104, %s106
      %p113 = scmp.eq.s32.totalorder %s28, 1
      %p114 = por %p112, %p113
      %p115 = scmp.ne.s32.totalorder %s106, %s107
      %p116 = scmp.eq.s32.totalorder %s28, 0
      %p117 = por %p115, %p116
      %p118 = scmp.ne.s32.totalorder %s106, %s107
      %p119 = scmp.eq.s32.totalorder %s29, 1
      %p120 = por %p118, %p119
      %p122 = scmp.ne.s32.totalorder %s107, %s121
      %p123 = scmp.eq.s32.totalorder %s29, 0
      %p124 = por %p122, %p123
      %s126 = sadd.s32 %s125, 1
      %p129 = scmp.eq.s32.totalorder %s23, 1
      %p130 = scmp.ne.s32.totalorder %s125, %s127
      %p131 = scmp.eq.s32.totalorder %s23, 0
      %p132 = por %p130, %p131
      %p133 = scmp.ne.s32.totalorder %s125, %s127
      %p134 = scmp.eq.s32.totalorder %s28, 1
      %p135 = por %p133, %p134
      %p136 = scmp.ne.s32.totalorder %s127, %s128
      %p137 = scmp.eq.s32.totalorder %s28, 0
      %p138 = por %p136, %p137
      %p139 = scmp.ne.s32.totalorder %s127, %s128
      %p140 = scmp.eq.s32.totalorder %s29, 1
      %p141 = por %p139, %p140
      %p143 = scmp.ne.s32.totalorder %s128, %s142
      %p144 = scmp.eq.s32.totalorder %s29, 0
      %p145 = por %p143, %p144
      %s147 = sadd.s32 %s146, 1
      %p150 = scmp.eq.s32.totalorder %s23, 1
      %p151 = scmp.ne.s32.totalorder %s146, %s148
      %p152 = scmp.eq.s32.totalorder %s23, 0
      %p153 = por %p151, %p152
      %p154 = scmp.ne.s32.totalorder %s146, %s148
      %p155 = scmp.eq.s32.totalorder %s28, 1
      %p156 = por %p154, %p155
      %p157 = scmp.ne.s32.totalorder %s148, %s149
      %p158 = scmp.eq.s32.totalorder %s28, 0
      %p159 = por %p157, %p158
      %p160 = scmp.ne.s32.totalorder %s148, %s149
      %p161 = scmp.eq.s32.totalorder %s29, 1
      %p162 = por %p160, %p161
      %p164 = scmp.ne.s32.totalorder %s149, %s163
      %p165 = scmp.eq.s32.totalorder %s29, 0
      %p166 = por %p164, %p165
      %s168 = sadd.s32 %s167, 1
      %p171 = scmp.eq.s32.totalorder %s23, 1
      %p172 = scmp.ne.s32.totalorder %s167, %s169
      %p173 = scmp.eq.s32.totalorder %s23, 0
      %p174 = por %p172, %p173
      %p175 = scmp.ne.s32.totalorder %s167, %s169
      %p176 = scmp.eq.s32.totalorder %s28, 1
      %p177 = por %p175, %p176
      %p178 = scmp.ne.s32.totalorder %s169, %s170
      %p179 = scmp.eq.s32.totalorder %s28, 0
      %p180 = por %p178, %p179
      %p181 = scmp.ne.s32.totalorder %s169, %s170
      %p182 = scmp.eq.s32.totalorder %s29, 1
      %p183 = por %p181, %p182
      %p185 = scmp.ne.s32.totalorder %s170, %s184
      %p186 = scmp.eq.s32.totalorder %s29, 0
      %p187 = por %p185, %p186
      %s189 = sadd.s32 %s188, 1
      %p192 = scmp.eq.s32.totalorder %s23, 1
      %p193 = scmp.ne.s32.totalorder %s188, %s190
      %p194 = scmp.eq.s32.totalorder %s23, 0
      %p195 = por %p193, %p194
      %p196 = scmp.ne.s32.totalorder %s188, %s190
      %p197 = scmp.eq.s32.totalorder %s28, 1
      %p198 = por %p196, %p197
      %p199 = scmp.ne.s32.totalorder %s190, %s191
      %p200 = scmp.eq.s32.totalorder %s28, 0
      %p201 = por %p199, %p200
      %p202 = scmp.ne.s32.totalorder %s190, %s191
      %p203 = scmp.eq.s32.totalorder %s29, 1
      %p204 = por %p202, %p203
      %p206 = scmp.ne.s32.totalorder %s191, %s205
      %p207 = scmp.eq.s32.totalorder %s29, 0
      %p208 = por %p206, %p207
      %s210 = sadd.s32 %s209, 1
      %p213 = scmp.eq.s32.totalorder %s23, 1
      %p214 = scmp.ne.s32.totalorder %s209, %s211
      %p215 = scmp.eq.s32.totalorder %s23, 0
      %p216 = por %p214, %p215
      %p217 = scmp.ne.s32.totalorder %s209, %s211
      %p218 = scmp.eq.s32.totalorder %s28, 1
      %p219 = por %p217, %p218
      %p220 = scmp.ne.s32.totalorder %s211, %s212
      %p221 = scmp.eq.s32.totalorder %s28, 0
      %p222 = por %p220, %p221
      %p223 = scmp.ne.s32.totalorder %s211, %s212
      %p224 = scmp.eq.s32.totalorder %s29, 1
      %p225 = por %p223, %p224
      %p227 = scmp.ne.s32.totalorder %s212, %s226
      %p228 = scmp.eq.s32.totalorder %s29, 0
      %p229 = por %p227, %p228
      %s231 = sadd.s32 %s230, 1
      %p234 = scmp.eq.s32.totalorder %s23, 1
      %p235 = scmp.ne.s32.totalorder %s230, %s232
      %p236 = scmp.eq.s32.totalorder %s23, 0
      %p237 = por %p235, %p236
      %p238 = scmp.ne.s32.totalorder %s230, %s232
      %p239 = scmp.eq.s32.totalorder %s28, 1
      %p240 = por %p238, %p239
      %p241 = scmp.ne.s32.totalorder %s232, %s233
      %p242 = scmp.eq.s32.totalorder %s28, 0
      %p243 = por %p241, %p242
      %p244 = scmp.ne.s32.totalorder %s232, %s233
      %p245 = scmp.eq.s32.totalorder %s29, 1
      %p246 = por %p244, %p245
      %p248 = scmp.ne.s32.totalorder %s233, %s247
      %p249 = scmp.eq.s32.totalorder %s29, 0
      %p250 = por %p248, %p249
      %s252 = sadd.s32 %s251, 1
      %p255 = scmp.eq.s32.totalorder %s23, 1
      %p256 = scmp.ne.s32.totalorder %s251, %s253
      %p257 = scmp.eq.s32.totalorder %s23, 0
      %p258 = por %p256, %p257
      %p259 = scmp.ne.s32.totalorder %s251, %s253
      %p260 = scmp.eq.s32.totalorder %s28, 1
      %p261 = por %p259, %p260
      %p262 = scmp.ne.s32.totalorder %s253, %s254
      %p263 = scmp.eq.s32.totalorder %s28, 0
      %p264 = por %p262, %p263
      %p265 = scmp.ne.s32.totalorder %s253, %s254
      %p266 = scmp.eq.s32.totalorder %s29, 1
      %p267 = por %p265, %p266
      %p269 = scmp.ne.s32.totalorder %s254, %s268
      %p270 = scmp.eq.s32.totalorder %s29, 0
      %p271 = por %p269, %p270
      %s273 = sadd.s32 %s272, 1
      %p276 = scmp.eq.s32.totalorder %s23, 1
      %p277 = scmp.ne.s32.totalorder %s272, %s274
      %p278 = scmp.eq.s32.totalorder %s23, 0
      %p279 = por %p277, %p278
      %p280 = scmp.ne.s32.totalorder %s272, %s274
      %p281 = scmp.eq.s32.totalorder %s28, 1
      %p282 = por %p280, %p281
      %p283 = scmp.ne.s32.totalorder %s274, %s275
      %p284 = scmp.eq.s32.totalorder %s28, 0
      %p285 = por %p283, %p284
      %p286 = scmp.ne.s32.totalorder %s274, %s275
      %p287 = scmp.eq.s32.totalorder %s29, 1
      %p288 = por %p286, %p287
      %p290 = scmp.ne.s32.totalorder %s275, %s289
      %p291 = scmp.eq.s32.totalorder %s29, 0
      %p292 = por %p290, %p291
      %s294 = sadd.s32 %s293, 1
      %p297 = scmp.eq.s32.totalorder %s23, 1
      %p298 = scmp.ne.s32.totalorder %s293, %s295
      %p299 = scmp.eq.s32.totalorder %s23, 0
      %p300 = por %p298, %p299
      %p301 = scmp.ne.s32.totalorder %s293, %s295
      %p302 = scmp.eq.s32.totalorder %s28, 1
      %p303 = por %p301, %p302
      %p304 = scmp.ne.s32.totalorder %s295, %s296
      %p305 = scmp.eq.s32.totalorder %s28, 0
      %p306 = por %p304, %p305
      %p307 = scmp.ne.s32.totalorder %s295, %s296
      %p308 = scmp.eq.s32.totalorder %s29, 1
      %p309 = por %p307, %p308
      %p311 = scmp.ne.s32.totalorder %s296, %s310
      %p312 = scmp.eq.s32.totalorder %s29, 0
      %p313 = por %p311, %p312
      %s314 = ssub.s32 %s23, %s30
      %p315 = scmp.eq.s32.totalorder %s314, 0
      %s317 = sadd.s32 %s316, 1
      %s318 = scalar_select %p315, %s316, %s317
      %p321 = pneg %p315
      %p322 = scmp.eq.s32.totalorder %s23, 1
      %p323 = por %p321, %p322
      %p324 = scmp.ne.s32.totalorder %s316, %s319
      %p325 = scmp.eq.s32.totalorder %s23, 0
      %p326 = por %p324, %p325
      %p327 = scmp.ne.s32.totalorder %s316, %s319
      %p328 = scmp.eq.s32.totalorder %s28, 1
      %p329 = por %p327, %p328
      %p330 = scmp.ne.s32.totalorder %s319, %s320
      %p331 = scmp.eq.s32.totalorder %s28, 0
      %p332 = por %p330, %p331
      %p333 = scmp.ne.s32.totalorder %s319, %s320
      %p334 = scmp.eq.s32.totalorder %s29, 1
      %p335 = por %p333, %p334
      %p337 = scmp.ne.s32.totalorder %s320, %s336
      %p338 = scmp.eq.s32.totalorder %s29, 0
      %p339 = por %p337, %p338
      %p340 = scmp.le.s32.totalorder 1, %s23
      %p341 = scmp.lt.s32.totalorder %s23, 3
      %p342 = pnand %p340, %p341
      %p343 = pneg %p342
      // Predicated region
      $region9: #{tpu_custom_call.1} parent=5 // pred_check
        _
      $region10: #{tpu_custom_call.1} parent=5 // pred_check_branch
        %345 = sbr.rel (%p342) target = $region12
      $region11: #{tpu_custom_call.1} parent=5 // pred_region
        %s346 = ssub.s32 %s23, 1
        // Predicated region
        $region13: #{tpu_custom_call.1} parent=11 // pred_check
          %p347 = pneg %p44
        $region14: #{tpu_custom_call.1} parent=11 // pred_check_branch
          %349 = sbr.rel (%p347) target = $region16
        $region15: #{tpu_custom_call.1} parent=11 // pred_region
          _
        $region16: #{tpu_custom_call.1} parent=11 // pred_fallthru
          _
        // Predicated region
        $region17: #{tpu_custom_call.1} parent=11 // pred_check
          %p350 = pneg %p117
        $region18: #{tpu_custom_call.1} parent=11 // pred_check_branch
          %352 = sbr.rel (%p350) target = $region20
        $region19: #{tpu_custom_call.1} parent=11 // pred_region
          _
        $region20: #{tpu_custom_call.1} parent=11 // pred_fallthru
          _
        // Predicated region
        $region21: #{tpu_custom_call.1} parent=11 // pred_check
          %p353 = pneg %p138
        $region22: #{tpu_custom_call.1} parent=11 // pred_check_branch
          %355 = sbr.rel (%p353) target = $region24
        $region23: #{tpu_custom_call.1} parent=11 // pred_region
          _
        $region24: #{tpu_custom_call.1} parent=11 // pred_fallthru
          _
        // Predicated region
        $region25: #{tpu_custom_call.1} parent=11 // pred_check
          %p356 = pneg %p159
        $region26: #{tpu_custom_call.1} parent=11 // pred_check_branch
          %358 = sbr.rel (%p356) target = $region28
        $region27: #{tpu_custom_call.1} parent=11 // pred_region
          _
        $region28: #{tpu_custom_call.1} parent=11 // pred_fallthru
          _
        // Predicated region
        $region29: #{tpu_custom_call.1} parent=11 // pred_check
          %p359 = pneg %p180
        $region30: #{tpu_custom_call.1} parent=11 // pred_check_branch
          %361 = sbr.rel (%p359) target = $region32
        $region31: #{tpu_custom_call.1} parent=11 // pred_region
          _
        $region32: #{tpu_custom_call.1} parent=11 // pred_fallthru
          _
        // Predicated region
        $region33: #{tpu_custom_call.1} parent=11 // pred_check
          %p362 = pneg %p201
        $region34: #{tpu_custom_call.1} parent=11 // pred_check_branch
          %364 = sbr.rel (%p362) target = $region36
        $region35: #{tpu_custom_call.1} parent=11 // pred_region
          _
        $region36: #{tpu_custom_call.1} parent=11 // pred_fallthru
          _
        // Predicated region
        $region37: #{tpu_custom_call.1} parent=11 // pred_check
          %p365 = pneg %p222
        $region38: #{tpu_custom_call.1} parent=11 // pred_check_branch
          %367 = sbr.rel (%p365) target = $region40
        $region39: #{tpu_custom_call.1} parent=11 // pred_region
          _
        $region40: #{tpu_custom_call.1} parent=11 // pred_fallthru
          _
        // Predicated region
        $region41: #{tpu_custom_call.1} parent=11 // pred_check
          %p368 = pneg %p243
        $region42: #{tpu_custom_call.1} parent=11 // pred_check_branch
          %370 = sbr.rel (%p368) target = $region44
        $region43: #{tpu_custom_call.1} parent=11 // pred_region
          _
        $region44: #{tpu_custom_call.1} parent=11 // pred_fallthru
          _
        // Predicated region
        $region45: #{tpu_custom_call.1} parent=11 // pred_check
          %p371 = pneg %p264
        $region46: #{tpu_custom_call.1} parent=11 // pred_check_branch
          %373 = sbr.rel (%p371) target = $region48
        $region47: #{tpu_custom_call.1} parent=11 // pred_region
          _
        $region48: #{tpu_custom_call.1} parent=11 // pred_fallthru
          _
        // Predicated region
        $region49: #{tpu_custom_call.1} parent=11 // pred_check
          %p374 = pneg %p285
        $region50: #{tpu_custom_call.1} parent=11 // pred_check_branch
          %376 = sbr.rel (%p374) target = $region52
        $region51: #{tpu_custom_call.1} parent=11 // pred_region
          _
        $region52: #{tpu_custom_call.1} parent=11 // pred_fallthru
          _
        // Predicated region
        $region53: #{tpu_custom_call.1} parent=11 // pred_check
          %p377 = pneg %p306
        $region54: #{tpu_custom_call.1} parent=11 // pred_check_branch
          %379 = sbr.rel (%p377) target = $region56
        $region55: #{tpu_custom_call.1} parent=11 // pred_region
          _
        $region56: #{tpu_custom_call.1} parent=11 // pred_fallthru
          _
      $region12: #{tpu_custom_call.1} parent=5 // pred_fallthru
        _
      %p380 = scmp.lt.s32.totalorder %s23, 2
      // Predicated region
      $region57: #{tpu_custom_call.1} parent=5 // pred_check
        %p381 = pneg %p380
      $region58: #{tpu_custom_call.1} parent=5 // pred_check_branch
        %383 = sbr.rel (%p381) target = $region60
      $region59: #{tpu_custom_call.1} parent=5 // pred_region
        // Predicated region
        $region61: #{tpu_custom_call.1} parent=59 // pred_check
          %p384 = pneg %p64
        $region62: #{tpu_custom_call.1} parent=59 // pred_check_branch
          %386 = sbr.rel (%p384) target = $region64
        $region63: #{tpu_custom_call.1} parent=59 // pred_region
          %p387 = scmp.lt.s32.totalorder %s23, 1
          %s388 = scalar_select %p387, %s23, 1
          %s389 = smul.addr %s388, 4
          %s390 = scalar_lea.vmem %s1, %s389
        $region64: #{tpu_custom_call.1} parent=59 // pred_fallthru
          _
        // Predicated region
        $region65: #{tpu_custom_call.1} parent=59 // pred_check
          %p391 = pneg %p90
        $region66: #{tpu_custom_call.1} parent=59 // pred_check_branch
          %393 = sbr.rel (%p391) target = $region68
        $region67: #{tpu_custom_call.1} parent=59 // pred_region
          %p394 = scmp.lt.s32.totalorder %s23, 1
          %s395 = scalar_select %p394, %s23, 1
          %s396 = smul.addr %s395, 2
          %s397 = scalar_lea.vmem %s2, %s396
        $region68: #{tpu_custom_call.1} parent=59 // pred_fallthru
          _
      $region60: #{tpu_custom_call.1} parent=5 // pred_fallthru
        _
      %p398 = scmp.le.s32.totalorder 1, %s23
      %p399 = scmp.lt.s32.totalorder %s23, 3
      %p400 = pnand %p398, %p399
      %p401 = pneg %p400
      // Predicated region
      $region69: #{tpu_custom_call.1} parent=5 // pred_check
        _
      $region70: #{tpu_custom_call.1} parent=5 // pred_check_branch
        %403 = sbr.rel (%p400) target = $region72
      $region71: #{tpu_custom_call.1} parent=5 // pred_region
        %s404 = ssub.s32 %s23, 1
        %p405 = pneg %p44
        %p406 = pneg %p41
        %p407 = scmp.lt.s32.totalorder %s28, 1
        %s408 = scalar_select %p407, %s28, 1
        %s409 = smul.addr %s408, 4
        %s410 = scalar_lea.vmem %s1, %s409
        %p411 = pneg %p70
        %p412 = pneg %p67
        %p413 = scmp.lt.s32.totalorder %s28, 1
        %s414 = scalar_select %p413, %s28, 1
        %s415 = smul.addr %s414, 2
        %s416 = scalar_lea.vmem %s2, %s415
        %p417 = pneg %p96
        %p418 = pneg %p93
        %p419 = pneg %p117
        %p420 = pneg %p114
        %p421 = pneg %p138
        %p422 = pneg %p135
        %p423 = pneg %p159
        %p424 = pneg %p156
        %p425 = pneg %p180
        %p426 = pneg %p177
        %p427 = pneg %p201
        %p428 = pneg %p198
        %p429 = pneg %p222
        %p430 = pneg %p219
        %p431 = pneg %p243
        %p432 = pneg %p240
        %p433 = pneg %p264
        %p434 = pneg %p261
        %p435 = pneg %p285
        %p436 = pneg %p282
        %p437 = pneg %p306
        %p438 = pneg %p303
        %p439 = pneg %p332
        %p440 = pneg %p329
        %s441 = sand.u32 %s319, 1
        %s442 = scalar_lea.sflag [#allocation4], %s441
        %s443 = sand.u32 %s319, 1
        %s444 = smul.addr %s443, 4
        %s445 = scalar_lea.vmem [#allocation3], %s444
        %p446 = scmp.lt.s32.totalorder %s28, 1
        %s447 = scalar_select %p446, %s28, 1
        %s448 = smul.addr %s447, 4
        %s449 = scalar_lea.vmem %s1, %s448
        %p450 = scmp.lt.s32.totalorder %s28, 1
        %s451 = scalar_select %p450, %s28, 1
        %s452 = smul.addr %s451, 2
        %s453 = scalar_lea.vmem %s2, %s452
        %s454 = sld [smem:[#allocation2]]
        %v455 = vld [vmem:[%s449] sm:$0xf]
        %v456 = vld [vmem:[%s453] sm:$0x3]
        %v457 = vld [vmem:[%s3] sm:$0xff]
        %v458 = vld [vmem:[%s3 + $0x8] sm:$0xff]
        %v459 = vld [vmem:[%s3 + $0x10] sm:$0xff]
        %v460 = vld [vmem:[%s3 + $0x18] sm:$0xff]
        %v461 = vld [vmem:[%s4] sm:$0xff]
        %v462 = vld [vmem:[%s4 + $0x8] sm:$0xff]
        %v463 = vld [vmem:[%s4 + $0x10] sm:$0xff]
        %v464 = vld [vmem:[%s4 + $0x18] sm:$0xff]
        %vm465 = vcmask 15360
        %v467 = vsel %vm465, %v461, 0
        %v470 = vsel %vm465, %v462, 0
        %v473 = vsel %vm465, %v463, 0
        %v476 = vsel %vm465, %v464, 0
        %vm478 = vcmask 1041408
        %v480 = vsel %vm478, %v456, 0
        %482 = vmatprep.subr.mxu0 0.0
        %483 = vmatpush1.msra.mxu0 %v480
        %484 = vmatprep.subr.mxu0 0.0
        %485 = vmatpush1.msra.mxu0 0.0
        %486 = vmatprep.subr.mxu0 0.0
        %487 = vmatpush1.msra.mxu0 0.0
        %488 = vmatprep.subr.mxu0 0.0
        %489 = vmatpush1.msra.mxu0 0.0
        %490 = vmatprep.subr.mxu0 0.0
        %491 = vmatpush1.msra.mxu0 0.0
        %492 = vmatprep.subr.mxu0 0.0
        %493 = vmatpush1.msra.mxu0 0.0
        %494 = vmatprep.subr.mxu0 0.0
        %495 = vmatpush1.msra.mxu0 0.0
        %496 = vmatprep.subr.mxu0 0.0
        %497 = vmatpush1.msra.mxu0 0.0
        %498 = vmatprep.subr.mxu0 0.0
        %499 = vmatpush1.msra.mxu0 0.0
        %500 = vmatprep.subr.mxu0 0.0
        %501 = vmatpush1.msra.mxu0 0.0
        %502 = vmatprep.subr.mxu0 0.0
        %503 = vmatpush1.msra.mxu0 0.0
        %504 = vmatprep.subr.mxu0 0.0
        %505 = vmatpush1.msra.mxu0 0.0
        %506 = vmatprep.subr.mxu0 0.0
        %507 = vmatpush1.msra.mxu0 0.0
        %508 = vmatprep.subr.mxu0 0.0
        %509 = vmatpush1.msra.mxu0 0.0
        %510 = vmatprep.subr.mxu0 0.0
        %511 = vmatpush1.msra.mxu0 0.0
        %512 = vmatprep.subr.mxu0 0.0
        %513 = vmatpush1.msra.mxu0 0.0
        %514 = vmatprep.subr.mxu0 0.0
        %515 = vmatpush1.msra.mxu0 0.0
        %516 = vmatprep.subr.mxu0 0.0
        %517 = vmatpush1.msra.mxu0 0.0
        %518 = vmatprep.subr.mxu0 0.0
        %519 = vmatpush1.msra.mxu0 0.0
        %520 = vmatprep.subr.mxu0 0.0
        %521 = vmatpush1.msra.mxu0 0.0
        %522 = vmatprep.subr.mxu0 0.0
        %523 = vmatpush1.msra.mxu0 0.0
        %524 = vmatprep.subr.mxu0 0.0
        %525 = vmatpush1.msra.mxu0 0.0
        %526 = vmatprep.subr.mxu0 0.0
        %527 = vmatpush1.msra.mxu0 0.0
        %528 = vmatprep.subr.mxu0 0.0
        %529 = vmatpush1.msra.mxu0 0.0
        %530 = vmatprep.subr.mxu0 0.0
        %531 = vmatpush1.msra.mxu0 0.0
        %532 = vmatprep.subr.mxu0 0.0
        %533 = vmatpush1.msra.mxu0 0.0
        %534 = vmatprep.subr.mxu0 0.0
        %535 = vmatpush1.msra.mxu0 0.0
        %536 = vmatprep.subr.mxu0 0.0
        %537 = vmatpush1.msra.mxu0 0.0
        %538 = vmatprep.subr.mxu0 0.0
        %539 = vmatpush1.msra.mxu0 0.0
        %540 = vmatprep.subr.mxu0 0.0
        %541 = vmatpush1.msra.mxu0 0.0
        %542 = vmatprep.subr.mxu0 0.0
        %543 = vmatpush1.msra.mxu0 0.0
        %544 = vmatprep.subr.mxu0 0.0
        %545 = vmatpush1.msra.mxu0 0.0
        %546 = vmatprep.mubr.f32.mxu0 0.0
        %547 = vmatmul.mubr.f32.gmra.mrb[0].mxu0 %v467
        %v548 = vpop.f32.mrb[0].mxu0
        %v549 = vadd.f32 0.0, %v548
        %v550 = vpop.f32.mrb[0].mxu0
        %551 = vmatprep.mubr.f32.mxu0 0.0
        %552 = vmatmul.mubr.f32.gmra.mrb[0].mxu0 %v470
        %v553 = vpop.f32.mrb[0].mxu0
        %v554 = vadd.f32 0.0, %v553
        %v555 = vpop.f32.mrb[0].mxu0
        %556 = vmatprep.mubr.f32.mxu0 0.0
        %557 = vmatmul.mubr.f32.gmra.mrb[0].mxu0 %v473
        %v558 = vpop.f32.mrb[0].mxu0
        %v559 = vadd.f32 0.0, %v558
        %v560 = vpop.f32.mrb[0].mxu0
        %561 = vmatprep.mubr.f32.mxu0 0.0
        %562 = vmatmul.mubr.f32.gmra.mrb[0].mxu0 %v476
        %v563 = vpop.f32.mrb[0].mxu0
        %v564 = vadd.f32 0.0, %v563
        %v565 = vpop.f32.mrb[0].mxu0
        %566 = vdwg.mxu0
        %vm567 = vcmask 31744
        %v569 = vsel %vm567, %v457, 0
        %v572 = vsel %vm567, %v458, 0
        %v575 = vsel %vm567, %v459, 0
        %v578 = vsel %vm567, %v460, 0
        %vm580 = vcmask 1043456
        %v582 = vsel %vm580, %v455, 0
        %584 = vmatprep.subr.mxu0 0.0
        %585 = vmatpush1.msra.mxu0 %v582
        %586 = vmatprep.subr.mxu0 0.0
        %587 = vmatpush1.msra.mxu0 0.0
        %588 = vmatprep.subr.mxu0 0.0
        %589 = vmatpush1.msra.mxu0 0.0
        %590 = vmatprep.subr.mxu0 0.0
        %591 = vmatpush1.msra.mxu0 0.0
        %592 = vmatprep.subr.mxu0 0.0
        %593 = vmatpush1.msra.mxu0 0.0
        %594 = vmatprep.subr.mxu0 0.0
        %595 = vmatpush1.msra.mxu0 0.0
        %596 = vmatprep.subr.mxu0 0.0
        %597 = vmatpush1.msra.mxu0 0.0
        %598 = vmatprep.subr.mxu0 0.0
        %599 = vmatpush1.msra.mxu0 0.0
        %600 = vmatprep.subr.mxu0 0.0
        %601 = vmatpush1.msra.mxu0 0.0
        %602 = vmatprep.subr.mxu0 0.0
        %603 = vmatpush1.msra.mxu0 0.0
        %604 = vmatprep.subr.mxu0 0.0
        %605 = vmatpush1.msra.mxu0 0.0
        %606 = vmatprep.subr.mxu0 0.0
        %607 = vmatpush1.msra.mxu0 0.0
        %608 = vmatprep.subr.mxu0 0.0
        %609 = vmatpush1.msra.mxu0 0.0
        %610 = vmatprep.subr.mxu0 0.0
        %611 = vmatpush1.msra.mxu0 0.0
        %612 = vmatprep.subr.mxu0 0.0
        %613 = vmatpush1.msra.mxu0 0.0
        %614 = vmatprep.subr.mxu0 0.0
        %615 = vmatpush1.msra.mxu0 0.0
        %616 = vmatprep.subr.mxu0 0.0
        %617 = vmatpush1.msra.mxu0 0.0
        %618 = vmatprep.subr.mxu0 0.0
        %619 = vmatpush1.msra.mxu0 0.0
        %620 = vmatprep.subr.mxu0 0.0
        %621 = vmatpush1.msra.mxu0 0.0
        %622 = vmatprep.subr.mxu0 0.0
        %623 = vmatpush1.msra.mxu0 0.0
        %624 = vmatprep.subr.mxu0 0.0
        %625 = vmatpush1.msra.mxu0 0.0
        %626 = vmatprep.subr.mxu0 0.0
        %627 = vmatpush1.msra.mxu0 0.0
        %628 = vmatprep.subr.mxu0 0.0
        %629 = vmatpush1.msra.mxu0 0.0
        %630 = vmatprep.subr.mxu0 0.0
        %631 = vmatpush1.msra.mxu0 0.0
        %632 = vmatprep.subr.mxu0 0.0
        %633 = vmatpush1.msra.mxu0 0.0
        %634 = vmatprep.subr.mxu0 0.0
        %635 = vmatpush1.msra.mxu0 0.0
        %636 = vmatprep.subr.mxu0 0.0
        %637 = vmatpush1.msra.mxu0 0.0
        %638 = vmatprep.subr.mxu0 0.0
        %639 = vmatpush1.msra.mxu0 0.0
        %640 = vmatprep.subr.mxu0 0.0
        %641 = vmatpush1.msra.mxu0 0.0
        %642 = vmatprep.subr.mxu0 0.0
        %643 = vmatpush1.msra.mxu0 0.0
        %644 = vmatprep.subr.mxu0 0.0
        %645 = vmatpush1.msra.mxu0 0.0
        %646 = vmatprep.subr.mxu0 0.0
        %647 = vmatpush1.msra.mxu0 0.0
        %648 = vmatprep.mubr.f32.mxu0 0.0
        %649 = vmatmul.mubr.f32.gmra.mrb[0].mxu0 %v569
        %v650 = vpop.f32.mrb[0].mxu0
        %v651 = vadd.f32 %v549, %v650
        %v652 = vpop.f32.mrb[0].mxu0
        %653 = vmatprep.mubr.f32.mxu0 0.0
        %654 = vmatmul.mubr.f32.gmra.mrb[0].mxu0 %v572
        %v655 = vpop.f32.mrb[0].mxu0
        %v656 = vadd.f32 %v554, %v655
        %v657 = vpop.f32.mrb[0].mxu0
        %658 = vmatprep.mubr.f32.mxu0 0.0
        %659 = vmatmul.mubr.f32.gmra.mrb[0].mxu0 %v575
        %v660 = vpop.f32.mrb[0].mxu0
        %v661 = vadd.f32 %v559, %v660
        %v662 = vpop.f32.mrb[0].mxu0
        %663 = vmatprep.mubr.f32.mxu0 0.0
        %664 = vmatmul.mubr.f32.gmra.mrb[0].mxu0 %v578
        %v665 = vpop.f32.mrb[0].mxu0
        %v666 = vadd.f32 %v564, %v665
        %v667 = vpop.f32.mrb[0].mxu0
        %668 = vdwg.mxu0
        %v669 = vld [vmem:[%s5] sm:$0xff]
        %v670 = vld [vmem:[%s5 + $0x8] sm:$0xff]
        %v671 = vld [vmem:[%s5 + $0x10] sm:$0xff]
        %v672 = vld [vmem:[%s5 + $0x18] sm:$0xff]
        %v673 = vstv %s454
        %v674 = vmul.f32 %v673, %v669
        %v675 = vmul.f32 %v673, %v670
        %v676 = vmul.f32 %v673, %v671
        %v677 = vmul.f32 %v673, %v672
        %679 = vset.pattern.permute.xlu0 0
        %680 = vperm.xlu0 %679, %v674
        %v681 = vpop.permute.xlu0 %680
        %684 = vset.pattern.permute.xlu0 0
        %685 = vperm.xlu0 %684, %v675
        %v686 = vpop.permute.xlu0 %685
        %689 = vset.pattern.permute.xlu0 0
        %690 = vperm.xlu0 %689, %v676
        %v691 = vpop.permute.xlu0 %690
        %694 = vset.pattern.permute.xlu0 0
        %695 = vperm.xlu0 %694, %v677
        %v696 = vpop.permute.xlu0 %695
        %v698 = vadd.f32 %v651, %v681
        %v699 = vadd.f32 %v656, %v686
        %v700 = vadd.f32 %v661, %v691
        %v701 = vadd.f32 %v666, %v696
        %v702 = vld [vmem:[%s6] sm:$0xff]
        %v703 = vld [vmem:[%s6 + $0x8] sm:$0xff]
        %v704 = vld [vmem:[%s6 + $0x10] sm:$0xff]
        %v705 = vld [vmem:[%s6 + $0x18] sm:$0xff]
        %707 = vset.pattern.permute.xlu0 0
        %708 = vperm.xlu0 %707, %v702
        %v709 = vpop.permute.xlu0 %708
        %712 = vset.pattern.permute.xlu0 0
        %713 = vperm.xlu0 %712, %v703
        %v714 = vpop.permute.xlu0 %713
        %717 = vset.pattern.permute.xlu0 0
        %718 = vperm.xlu0 %717, %v704
        %v719 = vpop.permute.xlu0 %718
        %722 = vset.pattern.permute.xlu0 0
        %723 = vperm.xlu0 %722, %v705
        %v724 = vpop.permute.xlu0 %723
        %v726 = vadd.f32 %v698, %v709
        %v727 = vadd.f32 %v699, %v714
        %v728 = vadd.f32 %v700, %v719
        %v729 = vadd.f32 %v701, %v724
        %v730 = vmax.f32 %v726, 0.0
        %v731 = vmax.f32 %v727, 0.0
        %v732 = vmax.f32 %v728, 0.0
        %v733 = vmax.f32 %v729, 0.0
        %v734 = vand.u32 2147483647, %v726
        %v735 = vand.u32 2147483647, %v727
        %v736 = vand.u32 2147483647, %v728
        %v737 = vand.u32 2147483647, %v729
        %v738 = vsub.f32 0.0, %v734
        %v739 = vsub.f32 0.0, %v735
        %v740 = vsub.f32 0.0, %v736
        %v741 = vsub.f32 0.0, %v737
        %v742 = vmul.f32 %v738, 1.442695
        %v743 = vpow.pop %v742
        %v744 = vmul.f32 %v739, 1.442695
        %v745 = vpow.pop %v744
        %v746 = vmul.f32 %v740, 1.442695
        %v747 = vpow.pop %v746
        %v748 = vmul.f32 %v741, 1.442695
        %v749 = vpow.pop %v748
        %v750 = vadd.f32 %v743, 1.0
        %v751 = vlog2.pop %v750
        %v752 = vmul.f32 %v751, 0.6931472
        %v753 = vmul.f32 -0.5, %v743
        %v754 = vadd.f32 %v753, 1.0
        %v755 = vmul.f32 %v754, %v743
        %v756 = vand.u32 2147483647, %v743
        %vm757 = vcmp.lt.f32.partialorder %v756, 0.0004427343
        %v758 = vsel %vm757, %v755, %v752
        %v759 = vadd.f32 %v745, 1.0
        %v760 = vlog2.pop %v759
        %v761 = vmul.f32 %v760, 0.6931472
        %v762 = vmul.f32 -0.5, %v745
        %v763 = vadd.f32 %v762, 1.0
        %v764 = vmul.f32 %v763, %v745
        %v765 = vand.u32 2147483647, %v745
        %vm766 = vcmp.lt.f32.partialorder %v765, 0.0004427343
        %v767 = vsel %vm766, %v764, %v761
        %v768 = vadd.f32 %v747, 1.0
        %v769 = vlog2.pop %v768
        %v770 = vmul.f32 %v769, 0.6931472
        %v771 = vmul.f32 -0.5, %v747
        %v772 = vadd.f32 %v771, 1.0
        %v773 = vmul.f32 %v772, %v747
        %v774 = vand.u32 2147483647, %v747
        %vm775 = vcmp.lt.f32.partialorder %v774, 0.0004427343
        %v776 = vsel %vm775, %v773, %v770
        %v777 = vadd.f32 %v749, 1.0
        %v778 = vlog2.pop %v777
        %v779 = vmul.f32 %v778, 0.6931472
        %v780 = vmul.f32 -0.5, %v749
        %v781 = vadd.f32 %v780, 1.0
        %v782 = vmul.f32 %v781, %v749
        %v783 = vand.u32 2147483647, %v749
        %vm784 = vcmp.lt.f32.partialorder %v783, 0.0004427343
        %v785 = vsel %vm784, %v782, %v779
        %v786 = vadd.f32 %v730, %v758
        %v787 = vadd.f32 %v731, %v767
        %v788 = vadd.f32 %v732, %v776
        %v789 = vadd.f32 %v733, %v785
        %v790 = vld [vmem:[%s7] sm:$0xff]
        %v791 = vld [vmem:[%s7 + $0x8] sm:$0xff]
        %v792 = vld [vmem:[%s7 + $0x10] sm:$0xff]
        %v793 = vld [vmem:[%s7 + $0x18] sm:$0xff]
        %v794 = vld [vmem:[%s8] sm:$0xff]
        %v795 = vld [vmem:[%s8 + $0x8] sm:$0xff]
        %v796 = vld [vmem:[%s8 + $0x10] sm:$0xff]
        %v797 = vld [vmem:[%s8 + $0x18] sm:$0xff]
        %v798 = vmul.f32 %v673, %v794
        %v799 = vmul.f32 %v673, %v795
        %v800 = vmul.f32 %v673, %v796
        %v801 = vmul.f32 %v673, %v797
        %803 = vset.pattern.permute.xlu0 0
        %804 = vperm.xlu0 %803, %v798
        %v805 = vpop.permute.xlu0 %804
        %808 = vset.pattern.permute.xlu0 0
        %809 = vperm.xlu0 %808, %v799
        %v810 = vpop.permute.xlu0 %809
        %813 = vset.pattern.permute.xlu0 0
        %814 = vperm.xlu0 %813, %v800
        %v815 = vpop.permute.xlu0 %814
        %818 = vset.pattern.permute.xlu0 0
        %819 = vperm.xlu0 %818, %v801
        %v820 = vpop.permute.xlu0 %819
        %vm822 = vcmask 261120
        %v824 = vsel %vm822, %v790, 0
        %v827 = vsel %vm822, %v791, 0
        %v830 = vsel %vm822, %v792, 0
        %v833 = vsel %vm822, %v793, 0
        %835 = vmatprep.subr.mxu0 0.0
        %836 = vmatpush1.msra.mxu0 %v786
        %837 = vmatprep.subr.mxu0 0.0
        %838 = vmatpush1.msra.mxu0 %v787
        %839 = vmatprep.subr.mxu0 0.0
        %840 = vmatpush1.msra.mxu0 %v788
        %841 = vmatprep.subr.mxu0 0.0
        %842 = vmatpush1.msra.mxu0 %v789
        %843 = vmatprep.subr.mxu0 0.0
        %844 = vmatpush1.msra.mxu0 0.0
        %845 = vmatprep.subr.mxu0 0.0
        %846 = vmatpush1.msra.mxu0 0.0
        %847 = vmatprep.subr.mxu0 0.0
        %848 = vmatpush1.msra.mxu0 0.0
        %849 = vmatprep.subr.mxu0 0.0
        %850 = vmatpush1.msra.mxu0 0.0
        %851 = vmatprep.subr.mxu0 0.0
        %852 = vmatpush1.msra.mxu0 0.0
        %853 = vmatprep.subr.mxu0 0.0
        %854 = vmatpush1.msra.mxu0 0.0
        %855 = vmatprep.subr.mxu0 0.0
        %856 = vmatpush1.msra.mxu0 0.0
        %857 = vmatprep.subr.mxu0 0.0
        %858 = vmatpush1.msra.mxu0 0.0
        %859 = vmatprep.subr.mxu0 0.0
        %860 = vmatpush1.msra.mxu0 0.0
        %861 = vmatprep.subr.mxu0 0.0
        %862 = vmatpush1.msra.mxu0 0.0
        %863 = vmatprep.subr.mxu0 0.0
        %864 = vmatpush1.msra.mxu0 0.0
        %865 = vmatprep.subr.mxu0 0.0
        %866 = vmatpush1.msra.mxu0 0.0
        %867 = vmatprep.subr.mxu0 0.0
        %868 = vmatpush1.msra.mxu0 0.0
        %869 = vmatprep.subr.mxu0 0.0
        %870 = vmatpush1.msra.mxu0 0.0
        %871 = vmatprep.subr.mxu0 0.0
        %872 = vmatpush1.msra.mxu0 0.0
        %873 = vmatprep.subr.mxu0 0.0
        %874 = vmatpush1.msra.mxu0 0.0
        %875 = vmatprep.subr.mxu0 0.0
        %876 = vmatpush1.msra.mxu0 0.0
        %877 = vmatprep.subr.mxu0 0.0
        %878 = vmatpush1.msra.mxu0 0.0
        %879 = vmatprep.subr.mxu0 0.0
        %880 = vmatpush1.msra.mxu0 0.0
        %881 = vmatprep.subr.mxu0 0.0
        %882 = vmatpush1.msra.mxu0 0.0
        %883 = vmatprep.subr.mxu0 0.0
        %884 = vmatpush1.msra.mxu0 0.0
        %885 = vmatprep.subr.mxu0 0.0
        %886 = vmatpush1.msra.mxu0 0.0
        %887 = vmatprep.subr.mxu0 0.0
        %888 = vmatpush1.msra.mxu0 0.0
        %889 = vmatprep.subr.mxu0 0.0
        %890 = vmatpush1.msra.mxu0 0.0
        %891 = vmatprep.subr.mxu0 0.0
        %892 = vmatpush1.msra.mxu0 0.0
        %893 = vmatprep.subr.mxu0 0.0
        %894 = vmatpush1.msra.mxu0 0.0
        %895 = vmatprep.subr.mxu0 0.0
        %896 = vmatpush1.msra.mxu0 0.0
        %897 = vmatprep.subr.mxu0 0.0
        %898 = vmatpush1.msra.mxu0 0.0
        %899 = vmatprep.mubr.f32.mxu0 0.0
        %900 = vmatmul.mubr.f32.gmra.mrb[0].mxu0 %v824
        %v901 = vpop.f32.mrb[0].mxu0
        %v902 = vadd.f32 %v805, %v901
        %v903 = vpop.f32.mrb[0].mxu0
        %904 = vmatprep.mubr.f32.mxu0 0.0
        %905 = vmatmul.mubr.f32.gmra.mrb[0].mxu0 %v827
        %v906 = vpop.f32.mrb[0].mxu0
        %v907 = vadd.f32 %v810, %v906
        %v908 = vpop.f32.mrb[0].mxu0
        %909 = vmatprep.mubr.f32.mxu0 0.0
        %910 = vmatmul.mubr.f32.gmra.mrb[0].mxu0 %v830
        %v911 = vpop.f32.mrb[0].mxu0
        %v912 = vadd.f32 %v815, %v911
        %v913 = vpop.f32.mrb[0].mxu0
        %914 = vmatprep.mubr.f32.mxu0 0.0
        %915 = vmatmul.mubr.f32.gmra.mrb[0].mxu0 %v833
        %v916 = vpop.f32.mrb[0].mxu0
        %v917 = vadd.f32 %v820, %v916
        %v918 = vpop.f32.mrb[0].mxu0
        %919 = vdwg.mxu0
        %v920 = vld [vmem:[%s9] sm:$0xff]
        %v921 = vld [vmem:[%s9 + $0x8] sm:$0xff]
        %v922 = vld [vmem:[%s9 + $0x10] sm:$0xff]
        %v923 = vld [vmem:[%s9 + $0x18] sm:$0xff]
        %925 = vset.pattern.permute.xlu0 0
        %926 = vperm.xlu0 %925, %v920
        %v927 = vpop.permute.xlu0 %926
        %930 = vset.pattern.permute.xlu0 0
        %931 = vperm.xlu0 %930, %v921
        %v932 = vpop.permute.xlu0 %931
        %935 = vset.pattern.permute.xlu0 0
        %936 = vperm.xlu0 %935, %v922
        %v937 = vpop.permute.xlu0 %936
        %940 = vset.pattern.permute.xlu0 0
        %941 = vperm.xlu0 %940, %v923
        %v942 = vpop.permute.xlu0 %941
        %v944 = vadd.f32 %v902, %v927
        %v945 = vadd.f32 %v907, %v932
        %v946 = vadd.f32 %v912, %v937
        %v947 = vadd.f32 %v917, %v942
        %v948 = vmax.f32 %v944, 0.0
        %v949 = vmax.f32 %v945, 0.0
        %v950 = vmax.f32 %v946, 0.0
        %v951 = vmax.f32 %v947, 0.0
        %v952 = vand.u32 2147483647, %v944
        %v953 = vand.u32 2147483647, %v945
        %v954 = vand.u32 2147483647, %v946
        %v955 = vand.u32 2147483647, %v947
        %v956 = vsub.f32 0.0, %v952
        %v957 = vsub.f32 0.0, %v953
        %v958 = vsub.f32 0.0, %v954
        %v959 = vsub.f32 0.0, %v955
        %v960 = vmul.f32 %v956, 1.442695
        %v961 = vpow.pop %v960
        %v962 = vmul.f32 %v957, 1.442695
        %v963 = vpow.pop %v962
        %v964 = vmul.f32 %v958, 1.442695
        %v965 = vpow.pop %v964
        %v966 = vmul.f32 %v959, 1.442695
        %v967 = vpow.pop %v966
        %v968 = vadd.f32 %v961, 1.0
        %v969 = vlog2.pop %v968
        %v970 = vmul.f32 %v969, 0.6931472
        %v971 = vmul.f32 -0.5, %v961
        %v972 = vadd.f32 %v971, 1.0
        %v973 = vmul.f32 %v972, %v961
        %v974 = vand.u32 2147483647, %v961
        %vm975 = vcmp.lt.f32.partialorder %v974, 0.0004427343
        %v976 = vsel %vm975, %v973, %v970
        %v977 = vadd.f32 %v963, 1.0
        %v978 = vlog2.pop %v977
        %v979 = vmul.f32 %v978, 0.6931472
        %v980 = vmul.f32 -0.5, %v963
        %v981 = vadd.f32 %v980, 1.0
        %v982 = vmul.f32 %v981, %v963
        %v983 = vand.u32 2147483647, %v963
        %vm984 = vcmp.lt.f32.partialorder %v983, 0.0004427343
        %v985 = vsel %vm984, %v982, %v979
        %v986 = vadd.f32 %v965, 1.0
        %v987 = vlog2.pop %v986
        %v988 = vmul.f32 %v987, 0.6931472
        %v989 = vmul.f32 -0.5, %v965
        %v990 = vadd.f32 %v989, 1.0
        %v991 = vmul.f32 %v990, %v965
        %v992 = vand.u32 2147483647, %v965
        %vm993 = vcmp.lt.f32.partialorder %v992, 0.0004427343
        %v994 = vsel %vm993, %v991, %v988
        %v995 = vadd.f32 %v967, 1.0
        %v996 = vlog2.pop %v995
        %v997 = vmul.f32 %v996, 0.6931472
        %v998 = vmul.f32 -0.5, %v967
        %v999 = vadd.f32 %v998, 1.0
        %v1000 = vmul.f32 %v999, %v967
        %v1001 = vand.u32 2147483647, %v967
        %vm1002 = vcmp.lt.f32.partialorder %v1001, 0.0004427343
        %v1003 = vsel %vm1002, %v1000, %v997
        %v1004 = vadd.f32 %v948, %v976
        %v1005 = vadd.f32 %v949, %v985
        %v1006 = vadd.f32 %v950, %v994
        %v1007 = vadd.f32 %v951, %v1003
        %v1008 = vld [vmem:[%s10] sm:$0xf]
        %v1009 = vld [vmem:[%s11] sm:$0xf]
        %v1010 = vmul.f32 %v673, %v1009
        %1012 = vset.pattern.permute.xlu0 0
        %1013 = vperm.xlu0 %1012, %v1010
        %v1014 = vpop.permute.xlu0 %1013
        %v1017 = vsel %vm822, %v1008, 0
        %1019 = vmatprep.subr.mxu0 0.0
        %1020 = vmatpush1.msra.mxu0 %v1004
        %1021 = vmatprep.subr.mxu0 0.0
        %1022 = vmatpush1.msra.mxu0 %v1005
        %1023 = vmatprep.subr.mxu0 0.0
        %1024 = vmatpush1.msra.mxu0 %v1006
        %1025 = vmatprep.subr.mxu0 0.0
        %1026 = vmatpush1.msra.mxu0 %v1007
        %1027 = vmatprep.subr.mxu0 0.0
        %1028 = vmatpush1.msra.mxu0 0.0
        %1029 = vmatprep.subr.mxu0 0.0
        %1030 = vmatpush1.msra.mxu0 0.0
        %1031 = vmatprep.subr.mxu0 0.0
        %1032 = vmatpush1.msra.mxu0 0.0
        %1033 = vmatprep.subr.mxu0 0.0
        %1034 = vmatpush1.msra.mxu0 0.0
        %1035 = vmatprep.subr.mxu0 0.0
        %1036 = vmatpush1.msra.mxu0 0.0
        %1037 = vmatprep.subr.mxu0 0.0
        %1038 = vmatpush1.msra.mxu0 0.0
        %1039 = vmatprep.subr.mxu0 0.0
        %1040 = vmatpush1.msra.mxu0 0.0
        %1041 = vmatprep.subr.mxu0 0.0
        %1042 = vmatpush1.msra.mxu0 0.0
        %1043 = vmatprep.subr.mxu0 0.0
        %1044 = vmatpush1.msra.mxu0 0.0
        %1045 = vmatprep.subr.mxu0 0.0
        %1046 = vmatpush1.msra.mxu0 0.0
        %1047 = vmatprep.subr.mxu0 0.0
        %1048 = vmatpush1.msra.mxu0 0.0
        %1049 = vmatprep.subr.mxu0 0.0
        %1050 = vmatpush1.msra.mxu0 0.0
        %1051 = vmatprep.subr.mxu0 0.0
        %1052 = vmatpush1.msra.mxu0 0.0
        %1053 = vmatprep.subr.mxu0 0.0
        %1054 = vmatpush1.msra.mxu0 0.0
        %1055 = vmatprep.subr.mxu0 0.0
        %1056 = vmatpush1.msra.mxu0 0.0
        %1057 = vmatprep.subr.mxu0 0.0
        %1058 = vmatpush1.msra.mxu0 0.0
        %1059 = vmatprep.subr.mxu0 0.0
        %1060 = vmatpush1.msra.mxu0 0.0
        %1061 = vmatprep.subr.mxu0 0.0
        %1062 = vmatpush1.msra.mxu0 0.0
        %1063 = vmatprep.subr.mxu0 0.0
        %1064 = vmatpush1.msra.mxu0 0.0
        %1065 = vmatprep.subr.mxu0 0.0
        %1066 = vmatpush1.msra.mxu0 0.0
        %1067 = vmatprep.subr.mxu0 0.0
        %1068 = vmatpush1.msra.mxu0 0.0
        %1069 = vmatprep.subr.mxu0 0.0
        %1070 = vmatpush1.msra.mxu0 0.0
        %1071 = vmatprep.subr.mxu0 0.0
        %1072 = vmatpush1.msra.mxu0 0.0
        %1073 = vmatprep.subr.mxu0 0.0
        %1074 = vmatpush1.msra.mxu0 0.0
        %1075 = vmatprep.subr.mxu0 0.0
        %1076 = vmatpush1.msra.mxu0 0.0
        %1077 = vmatprep.subr.mxu0 0.0
        %1078 = vmatpush1.msra.mxu0 0.0
        %1079 = vmatprep.subr.mxu0 0.0
        %1080 = vmatpush1.msra.mxu0 0.0
        %1081 = vmatprep.subr.mxu0 0.0
        %1082 = vmatpush1.msra.mxu0 0.0
        %1083 = vmatprep.mubr.f32.mxu0 0.0
        %1084 = vmatmul.mubr.f32.gmra.mrb[0].mxu0 %v1017
        %v1085 = vpop.f32.mrb[0].mxu0
        %v1086 = vadd.f32 %v1014, %v1085
        %v1087 = vpop.f32.mrb[0].mxu0
        %1088 = vdwg.mxu0
        %v1089 = vld [vmem:[%s12] sm:$0xf]
        %1091 = vset.pattern.permute.xlu0 0
        %1092 = vperm.xlu0 %1091, %v1089
        %v1093 = vpop.permute.xlu0 %1092
        %v1095 = vadd.f32 %v1086, %v1093
        %1096 = vst [vmem:[%s445] sm:$0xf] %v1095
        %s1097 = sand.u32 %s319, 1
        %s1098 = scalar_lea.sflag [#allocation4], %s1097
        %s1099 = sand.u32 %s319, 1
        %s1100 = smul.addr %s1099, 4
        %s1101 = scalar_lea.vmem [#allocation3], %s1100
        // Predicated region
        $region73: #{tpu_custom_call.1} parent=71 // pred_check
          %p1102 = pneg %p329
        $region74: #{tpu_custom_call.1} parent=71 // pred_check_branch
          %1104 = sbr.rel (%p1102) target = $region76
        $region75: #{tpu_custom_call.1} parent=71 // pred_region
          %s1106 = ssub.s32 64, 64
          %1107 = vsyncadd %s1098, %s1106
          %s1108 = smul.addr %s28, 64
          %s1109 = scalar_lea.hbm %s13, %s1108
          %s1111 = sshll.u32 %s1101, 4
          %s1112 = int_to_ptr.vmem [resolvable:$true] %s1111
          %1114 = dma.vmem_to_hbm [thread:$0]  %s1112, 64, %s1109, %s1098
        $region76: #{tpu_custom_call.1} parent=71 // pred_fallthru
          _
      $region72: #{tpu_custom_call.1} parent=5 // pred_fallthru
        _
      %p1115 = scmp.le.s32.totalorder 2, %s23
      // Predicated region
      $region77: #{tpu_custom_call.1} parent=5 // pred_check
        %p1116 = pneg %p1115
      $region78: #{tpu_custom_call.1} parent=5 // pred_check_branch
        %1118 = sbr.rel (%p1116) target = $region80
      $region79: #{tpu_custom_call.1} parent=5 // pred_region
        %s1119 = ssub.s32 %s23, 2
        // Predicated region
        $region81: #{tpu_custom_call.1} parent=79 // pred_check
          %p1120 = pneg %p335
        $region82: #{tpu_custom_call.1} parent=79 // pred_check_branch
          %1122 = sbr.rel (%p1120) target = $region84
        $region83: #{tpu_custom_call.1} parent=79 // pred_region
          %s1123 = sand.u32 %s320, 1
          %s1124 = scalar_lea.sflag [#allocation4], %s1123
          %s1125 = sand.u32 %s320, 1
          %s1126 = smul.addr %s1125, 4
          %s1127 = scalar_lea.vmem [#allocation3], %s1126
          %1128 = dma.done %s1124, 64
        $region84: #{tpu_custom_call.1} parent=79 // pred_fallthru
          _
      $region80: #{tpu_custom_call.1} parent=5 // pred_fallthru
        _
    $region6: #{tpu_custom_call.1} parent=1 // loop_footer
      %s27 = sadd.s32 1, %s23
    $region7: #{tpu_custom_call.1} parent=1 // loop_footer_branch
      %22 = sbr.rel target = $region3
    $region8: #{tpu_custom_call.1} parent=1 // loop_exit
      _
    %1129 = vsyncpa [#allocation4], 1
    %s1130 = scalar_lea.sflag [#allocation4], 1
    %1131 = vsyncpa %s1130, 1

</llo_original>
